<compile_context>
chip_gen: v7x
topology: tpu7x:2x2x1
jax: 0.10.0
libtpu: 0.0.40
codegen_flags: <defaults>
</compile_context>

<pallas_src>
import jax
import jax.numpy as jnp
from jax import lax
from jax.experimental import pallas as pl
from jax.experimental.pallas import tpu as pltpu


# ----------------------------------------------------------------------------
# Fused kernel: single LSTM step (from zero state) + LayerNorm + Linear head.
# All operands are tiny (< 64 KiB total) -> single-shot kernel, whole arrays in VMEM.
# ----------------------------------------------------------------------------
def lstm_nn_fused_kernel(x_ref, wi_ref, wg_ref, wo_ref, bi_ref, bg_ref, bo_ref,
                         gamma_ref, beta_ref, w_out_ref, b_out_ref, out_ref):
    # Only timestep 0 feeds the head (h0 = c0 = 0 collapse). Slice it here so the
    # wrapper does not need a separate XLA slice op.
    x0 = x_ref[:, 0, :].astype(jnp.float32)                    # (B, F)

    # Per-gate matmuls against pre-split (F, H) weight blocks; PyTorch gate order is
    # [i, f, g, o] along 4H, the f block is dead (multiplies c0 == 0) and is not shipped.
    # NOTE: at B=2 a VPU broadcast-FMA sum over F could replace the MXU dots; kept on
    # the MXU so the kernel stays efficient if B grows.
    gi = jnp.dot(x0, wi_ref[...], preferred_element_type=jnp.float32) + bi_ref[...]
    gg = jnp.dot(x0, wg_ref[...], preferred_element_type=jnp.float32) + bg_ref[...]
    go = jnp.dot(x0, wo_ref[...], preferred_element_type=jnp.float32) + bo_ref[...]

    i_g = jax.nn.sigmoid(gi)
    g_g = jnp.tanh(gg)
    o_g = jax.nn.sigmoid(go)

    c1 = i_g * g_g                                             # f_g * c0 == 0
    h1 = o_g * jnp.tanh(c1)                                    # (B, H) == lstm_output[:, 0, :]

    # LayerNorm (PyTorch eps = 1e-5), one-pass stats: the two cross-lane reductions
    # are independent, removing one XLU-reduce latency from the critical path.
    # h1 is bounded in (-1, 1) so E[x^2] - E[x]^2 is numerically safe here.
    H = h1.shape[-1]
    inv_h = 1.0 / H
    s1 = jnp.sum(h1, axis=-1, keepdims=True)
    s2 = jnp.sum(h1 * h1, axis=-1, keepdims=True)
    mean = s1 * inv_h
    var = s2 * inv_h - mean * mean
    y = (h1 - mean) * lax.rsqrt(var + 1e-5) * gamma_ref[...] + beta_ref[...]

    # TODO(synk): Dropout is identity in eval mode; training-time dropout mask not implemented.

    # Linear head: (B, H) @ (H, F) + (1, F); write the (B, 1, F) output directly.
    out = jnp.dot(y, w_out_ref[...], preferred_element_type=jnp.float32) + b_out_ref[...]
    out_ref[:, 0, :] = out.astype(out_ref.dtype)


# ----------------------------------------------------------------------------
# Wrapper (single pallas_call, no pre/post XLA ops)
# ----------------------------------------------------------------------------
@jax.jit
def lstm_nn_forward(x, params):
    B, T, F = x.shape

    # NOTE: if B ever grows to production sizes, add grid=(B // b_tile,) over the batch
    # with dimension_semantics=("parallel",) so v7x's two TensorCores split the work.
    # At B=2 a grid would only add pipeline overhead.
    out = pl.pallas_call(
        lstm_nn_fused_kernel,
        out_shape=jax.ShapeDtypeStruct((B, 1, F), jnp.float32),
        in_specs=[pl.BlockSpec(memory_space=pltpu.MemorySpace.VMEM)] * 11,
        out_specs=pl.BlockSpec(memory_space=pltpu.MemorySpace.VMEM),
        compiler_params=pltpu.CompilerParams(vmem_limit_bytes=4 * 1024 * 1024),
    )(
        x,                                                     # (B, T, F) -- only t=0 read
        params["w_i"], params["w_g"], params["w_o"],           # (F, H) each
        params["b_i"], params["b_g"], params["b_o"],           # (1, H) each
        params["ln_gamma2d"], params["ln_beta2d"],             # (1, H) each
        params["w_out_t"],                                     # (H, F)
        params["b_out2d"],                                     # (1, F)
    )
    return out                                                 # (B, 1, F) == unsqueeze(1)


# ----------------------------------------------------------------------------
# Deterministic parameter init (mirrors the PyTorch module's __init__).
# All kernel-side layouts (gate split, bias combine, 2-D reshapes) are
# precomputed HERE so the per-call path is a single pallas_call.
# ----------------------------------------------------------------------------
def init_params(key, input_features_num, hidden, dtype=jnp.float32):
    F, H = input_features_num, hidden
    k_ih, k_hh, k_w, k_b = jax.random.split(key, 4)

    def xavier_uniform(k, shape):                              # gain = 1
        fan_out, fan_in = shape
        bound = (6.0 / (fan_in + fan_out)) ** 0.5
        return jax.random.uniform(k, shape, dtype, -bound, bound)

    w_ih = xavier_uniform(k_ih, (4 * H, F))                    # torch weight_ih_l0
    w_hh = xavier_uniform(k_hh, (4 * H, H))                    # torch weight_hh_l0
    b_ih = jnp.zeros((4 * H,), dtype)                          # biases filled with 0 in __init__
    b_hh = jnp.zeros((4 * H,), dtype)

    # torch.nn.Linear(H, F) default init: U(-1/sqrt(H), 1/sqrt(H))
    lin_bound = 1.0 / (H ** 0.5)
    w_out = jax.random.uniform(k_w, (F, H), dtype, -lin_bound, lin_bound)
    b_out = jax.random.uniform(k_b, (F,), dtype, -lin_bound, lin_bound)

    b_comb = b_ih + b_hh
    ln_gamma = jnp.ones((H,), dtype)
    ln_beta = jnp.zeros((H,), dtype)

    return {
        # ---- kernel-layout params (precomputed once) ----
        # PyTorch gate order along 4H is [i, f, g, o]; the f block is dead (c0 == 0).
        "w_i": w_ih[0 * H:1 * H, :].T,                         # (F, H) input gate
        "w_g": w_ih[2 * H:3 * H, :].T,                         # (F, H) cell candidate
        "w_o": w_ih[3 * H:4 * H, :].T,                         # (F, H) output gate
        "b_i": b_comb[0 * H:1 * H].reshape(1, H),
        "b_g": b_comb[2 * H:3 * H].reshape(1, H),
        "b_o": b_comb[3 * H:4 * H].reshape(1, H),
        "ln_gamma2d": ln_gamma.reshape(1, H),
        "ln_beta2d": ln_beta.reshape(1, H),
        "w_out_t": w_out.T,                                    # (H, F)
        "b_out2d": b_out.reshape(1, F),
        # ---- reference-layout params (full LSTM scan, verification only) ----
        "w_ih_t": w_ih.T,                                      # (F, 4H)
        "w_hh_t": w_hh.T,                                      # (H, 4H)
        "b_ih": b_ih,
        "b_hh": b_hh,
        "ln_gamma": ln_gamma,
        "ln_beta": ln_beta,
        "b_out": b_out,
    }


# ----------------------------------------------------------------------------
# Pure-JAX reference (full T-step LSTM scan, for correctness verification)
# ----------------------------------------------------------------------------
def reference_forward(x, params):
    B, T, F = x.shape
    H = params["ln_gamma"].shape[0]
    b = params["b_ih"] + params["b_hh"]

    def step(carry, x_t):
        h, c = carry
        gates = x_t @ params["w_ih_t"] + h @ params["w_hh_t"] + b
        i = jax.nn.sigmoid(gates[:, :H])
        f = jax.nn.sigmoid(gates[:, H:2 * H])
        g = jnp.tanh(gates[:, 2 * H:3 * H])
        o = jax.nn.sigmoid(gates[:, 3 * H:])
        c = f * c + i * g
        h = o * jnp.tanh(c)
        return (h, c), h

    init = (jnp.zeros((B, H), jnp.float32), jnp.zeros((B, H), jnp.float32))
    _, hs = lax.scan(step, init, jnp.transpose(x, (1, 0, 2)))
    h0 = hs[0]                                                 # == lstm_output[:, 0, :]
    mean = h0.mean(-1, keepdims=True)
    var = ((h0 - mean) ** 2).mean(-1, keepdims=True)
    y = (h0 - mean) / jnp.sqrt(var + 1e-5) * params["ln_gamma"] + params["ln_beta"]
    out = y @ params["w_out_t"] + params["b_out"]
    return out[:, None, :]


if __name__ == "__main__":
    B, T, F, H = 2, 8, 8, 32                                   # input_features_num=8, hidden=32
    key = jax.random.PRNGKey(0)
    k_x, k_p = jax.random.split(key)

    x = jax.random.normal(k_x, (B, T, F), dtype=jnp.float32)
    params = init_params(k_p, F, H)

    out = lstm_nn_forward(x, params)
    out = jax.block_until_ready(out)

    ref = reference_forward(x, params)
    assert out.shape == (B, 1, F), out.shape
    assert jnp.allclose(out, ref, atol=3e-5, rtol=1e-5), "mismatch vs. reference"

    print("KERNEL_OK")
</pallas_src>

<mosaic_0001>
module attributes {stable_mosaic.version = 11 : i64} {
  func.func @lstm_nn_fused_kernel(%arg0: memref<2x8x8xf32, #tpu.memory_space<vmem>>, %arg1: memref<8x32xf32, #tpu.memory_space<vmem>>, %arg2: memref<8x32xf32, #tpu.memory_space<vmem>>, %arg3: memref<8x32xf32, #tpu.memory_space<vmem>>, %arg4: memref<1x32xf32, #tpu.memory_space<vmem>>, %arg5: memref<1x32xf32, #tpu.memory_space<vmem>>, %arg6: memref<1x32xf32, #tpu.memory_space<vmem>>, %arg7: memref<1x32xf32, #tpu.memory_space<vmem>>, %arg8: memref<1x32xf32, #tpu.memory_space<vmem>>, %arg9: memref<32x8xf32, #tpu.memory_space<vmem>>, %arg10: memref<1x8xf32, #tpu.memory_space<vmem>>, %arg11: memref<2x1x8xf32, #tpu.memory_space<vmem>>) attributes {dimension_semantics = [], scalar_prefetch = 0 : i64, scratch_operands = 0 : i64, tpu.core_type = #tpu.core_type<tc>} {
    %c0 = arith.constant 0 : index
    %c0_0 = arith.constant 0 : index
    %c0_1 = arith.constant 0 : index
    %0 = vector.load %arg0[%c0, %c0_0, %c0_1] : memref<2x8x8xf32, #tpu.memory_space<vmem>>, vector<2x1x8xf32>
    %1 = vector.shape_cast %0 : vector<2x1x8xf32> to vector<2x8xf32>
    %c0_2 = arith.constant 0 : index
    %c0_3 = arith.constant 0 : index
    %2 = vector.load %arg1[%c0_2, %c0_3] : memref<8x32xf32, #tpu.memory_space<vmem>>, vector<8x32xf32>
    %cst = arith.constant dense<0.000000e+00> : vector<2x32xf32>
    %3 = tpu.matmul %1, %2, %cst {dimension_numbers = #tpu.dot_dimension_numbers<[1], [0], [0], [1], [0, 0, 1, 1], [], []>} : vector<2x8xf32>, vector<8x32xf32>, vector<2x32xf32> -> vector<2x32xf32>
    %c0_4 = arith.constant 0 : index
    %c0_5 = arith.constant 0 : index
    %4 = vector.load %arg4[%c0_4, %c0_5] : memref<1x32xf32, #tpu.memory_space<vmem>>, vector<1x32xf32>
    %5 = vector.broadcast %4 : vector<1x32xf32> to vector<2x32xf32>
    %6 = arith.addf %3, %5 : vector<2x32xf32>
    %c0_6 = arith.constant 0 : index
    %c0_7 = arith.constant 0 : index
    %7 = vector.load %arg2[%c0_6, %c0_7] : memref<8x32xf32, #tpu.memory_space<vmem>>, vector<8x32xf32>
    %cst_8 = arith.constant dense<0.000000e+00> : vector<2x32xf32>
    %8 = tpu.matmul %1, %7, %cst_8 {dimension_numbers = #tpu.dot_dimension_numbers<[1], [0], [0], [1], [0, 0, 1, 1], [], []>} : vector<2x8xf32>, vector<8x32xf32>, vector<2x32xf32> -> vector<2x32xf32>
    %c0_9 = arith.constant 0 : index
    %c0_10 = arith.constant 0 : index
    %9 = vector.load %arg5[%c0_9, %c0_10] : memref<1x32xf32, #tpu.memory_space<vmem>>, vector<1x32xf32>
    %10 = vector.broadcast %9 : vector<1x32xf32> to vector<2x32xf32>
    %11 = arith.addf %8, %10 : vector<2x32xf32>
    %c0_11 = arith.constant 0 : index
    %c0_12 = arith.constant 0 : index
    %12 = vector.load %arg3[%c0_11, %c0_12] : memref<8x32xf32, #tpu.memory_space<vmem>>, vector<8x32xf32>
    %cst_13 = arith.constant dense<0.000000e+00> : vector<2x32xf32>
    %13 = tpu.matmul %1, %12, %cst_13 {dimension_numbers = #tpu.dot_dimension_numbers<[1], [0], [0], [1], [0, 0, 1, 1], [], []>} : vector<2x8xf32>, vector<8x32xf32>, vector<2x32xf32> -> vector<2x32xf32>
    %c0_14 = arith.constant 0 : index
    %c0_15 = arith.constant 0 : index
    %14 = vector.load %arg6[%c0_14, %c0_15] : memref<1x32xf32, #tpu.memory_space<vmem>>, vector<1x32xf32>
    %15 = vector.broadcast %14 : vector<1x32xf32> to vector<2x32xf32>
    %16 = arith.addf %13, %15 : vector<2x32xf32>
    %17 = arith.negf %6 : vector<2x32xf32>
    %18 = math.exp %17 : vector<2x32xf32>
    %cst_16 = arith.constant 1.000000e+00 : f32
    %19 = vector.broadcast %cst_16 : f32 to vector<2x32xf32>
    %20 = arith.addf %19, %18 : vector<2x32xf32>
    %21 = arith.divf %19, %20 : vector<2x32xf32>
    %22 = math.tanh %11 : vector<2x32xf32>
    %23 = arith.negf %16 : vector<2x32xf32>
    %24 = math.exp %23 : vector<2x32xf32>
    %cst_17 = arith.constant 1.000000e+00 : f32
    %25 = vector.broadcast %cst_17 : f32 to vector<2x32xf32>
    %26 = arith.addf %25, %24 : vector<2x32xf32>
    %27 = arith.divf %25, %26 : vector<2x32xf32>
    %28 = arith.mulf %21, %22 : vector<2x32xf32>
    %29 = math.tanh %28 : vector<2x32xf32>
    %30 = arith.mulf %27, %29 : vector<2x32xf32>
    %cst_18 = arith.constant dense<0.000000e+00> : vector<2xf32>
    %31 = vector.multi_reduction <add>, %30, %cst_18 [1] : vector<2x32xf32> to vector<2xf32>
    %32 = vector.shape_cast %31 : vector<2xf32> to vector<2x1xf32>
    %33 = arith.mulf %30, %30 : vector<2x32xf32>
    %cst_19 = arith.constant dense<0.000000e+00> : vector<2xf32>
    %34 = vector.multi_reduction <add>, %33, %cst_19 [1] : vector<2x32xf32> to vector<2xf32>
    %35 = vector.shape_cast %34 : vector<2xf32> to vector<2x1xf32>
    %cst_20 = arith.constant 3.125000e-02 : f32
    %36 = vector.broadcast %cst_20 : f32 to vector<2x1xf32>
    %37 = arith.mulf %32, %36 : vector<2x1xf32>
    %cst_21 = arith.constant 3.125000e-02 : f32
    %38 = vector.broadcast %cst_21 : f32 to vector<2x1xf32>
    %39 = arith.mulf %35, %38 : vector<2x1xf32>
    %40 = arith.mulf %37, %37 : vector<2x1xf32>
    %41 = arith.subf %39, %40 : vector<2x1xf32>
    %42 = vector.broadcast %37 : vector<2x1xf32> to vector<2x32xf32>
    %43 = arith.subf %30, %42 : vector<2x32xf32>
    %cst_22 = arith.constant 9.99999974E-6 : f32
    %44 = vector.broadcast %cst_22 : f32 to vector<2x1xf32>
    %45 = arith.addf %41, %44 : vector<2x1xf32>
    %46 = math.rsqrt %45 : vector<2x1xf32>
    %47 = vector.broadcast %46 : vector<2x1xf32> to vector<2x32xf32>
    %48 = arith.mulf %43, %47 : vector<2x32xf32>
    %c0_23 = arith.constant 0 : index
    %c0_24 = arith.constant 0 : index
    %49 = vector.load %arg7[%c0_23, %c0_24] : memref<1x32xf32, #tpu.memory_space<vmem>>, vector<1x32xf32>
    %50 = vector.broadcast %49 : vector<1x32xf32> to vector<2x32xf32>
    %51 = arith.mulf %48, %50 : vector<2x32xf32>
    %c0_25 = arith.constant 0 : index
    %c0_26 = arith.constant 0 : index
    %52 = vector.load %arg8[%c0_25, %c0_26] : memref<1x32xf32, #tpu.memory_space<vmem>>, vector<1x32xf32>
    %53 = vector.broadcast %52 : vector<1x32xf32> to vector<2x32xf32>
    %54 = arith.addf %51, %53 : vector<2x32xf32>
    %c0_27 = arith.constant 0 : index
    %c0_28 = arith.constant 0 : index
    %55 = vector.load %arg9[%c0_27, %c0_28] : memref<32x8xf32, #tpu.memory_space<vmem>>, vector<32x8xf32>
    %cst_29 = arith.constant dense<0.000000e+00> : vector<2x8xf32>
    %56 = tpu.matmul %54, %55, %cst_29 {dimension_numbers = #tpu.dot_dimension_numbers<[1], [0], [0], [1], [0, 0, 1, 1], [], []>} : vector<2x32xf32>, vector<32x8xf32>, vector<2x8xf32> -> vector<2x8xf32>
    %c0_30 = arith.constant 0 : index
    %c0_31 = arith.constant 0 : index
    %57 = vector.load %arg10[%c0_30, %c0_31] : memref<1x8xf32, #tpu.memory_space<vmem>>, vector<1x8xf32>
    %58 = vector.broadcast %57 : vector<1x8xf32> to vector<2x8xf32>
    %59 = arith.addf %56, %58 : vector<2x8xf32>
    %c0_32 = arith.constant 0 : index
    %c0_33 = arith.constant 0 : index
    %c0_34 = arith.constant 0 : index
    %60 = vector.load %arg11[%c0_32, %c0_33, %c0_34] : memref<2x1x8xf32, #tpu.memory_space<vmem>>, vector<2x1x8xf32>
    %61 = vector.shape_cast %60 : vector<2x1x8xf32> to vector<2x8xf32>
    %62 = vector.shape_cast %59 : vector<2x8xf32> to vector<2x1x8xf32>
    tpu.vector_store %arg11[%c0_32, %c0_33, %c0_34], %62 {strides = array<i32>} : memref<2x1x8xf32, #tpu.memory_space<vmem>>, vector<2x1x8xf32>,
    return
  }
}

</mosaic_0001>

<llo_original>
// kernel: lstm_nn_forward.1
$region0: #{lstm_nn_forward.1}
  #allocation0 [shape = 'u32[]', space=smem, size = 0x4, offset = 0x4, fixed_abs, tag = 'smem constant byte address 0x4 - core index']
  #allocation1 [shape = 'u32[144,128]{1,0:T(1,128)}', space=vmem, size = 0x12000, scoped, tag = 'internal scratch']
  %s0 = inlined_call_operand.vmem [shape: f32[2,8,8], index: 0, kind: input, shape index: {}]
  %s1 = inlined_call_operand.vmem [shape: f32[8,32], index: 1, kind: input, shape index: {}]
  %s2 = inlined_call_operand.vmem [shape: f32[8,32], index: 2, kind: input, shape index: {}]
  %s3 = inlined_call_operand.vmem [shape: f32[8,32], index: 3, kind: input, shape index: {}]
  %s4 = inlined_call_operand.vmem [shape: f32[1,32], index: 4, kind: input, shape index: {}]
  %s5 = inlined_call_operand.vmem [shape: f32[1,32], index: 5, kind: input, shape index: {}]
  %s6 = inlined_call_operand.vmem [shape: f32[1,32], index: 6, kind: input, shape index: {}]
  %s7 = inlined_call_operand.vmem [shape: f32[1,32], index: 7, kind: input, shape index: {}]
  %s8 = inlined_call_operand.vmem [shape: f32[1,32], index: 8, kind: input, shape index: {}]
  %s9 = inlined_call_operand.vmem [shape: f32[32,8], index: 9, kind: input, shape index: {}]
  %s10 = inlined_call_operand.vmem [shape: f32[1,8], index: 10, kind: input, shape index: {}]
  %s11 = inlined_call_operand.hbm [shape: f32[2,1,8], index: 11, kind: output, shape index: {}]
  %s12 = sld [smem:[#allocation0]]
  $region54: #{lstm_nn_forward.1} parent=0
    _
  %s14 = ssub.s32 1, %s12
  %s15 = scalar_select 0, %s14, %s12
  $region1: #{lstm_nn_forward.1} parent=0
    #allocation2 [shape = 'u8[1024]{0}', space=vmem, size = 0x400, scoped, tag = 'output window, operand 0, single buffered']
    #allocation3 [shape = 's32[1]{0}', space=sflag, size = 0x4, scoped, tag = 'scoped memory for lstm_nn_forward.1']
    %16 = vsyncpa [#allocation3], 0
    // Predicated region
    $region2: #{lstm_nn_forward.1} parent=1 // pred_check
      _
    $region3: #{lstm_nn_forward.1} parent=1 // pred_check_branch
      %18 = sbr.rel (0) target = $region5
    $region4: #{lstm_nn_forward.1} parent=1 // pred_region
      _
    $region5: #{lstm_nn_forward.1} parent=1 // pred_fallthru
      _
    // Predicated region
    $region6: #{lstm_nn_forward.1} parent=1 // pred_check
      _
    $region7: #{lstm_nn_forward.1} parent=1 // pred_check_branch
      %20 = sbr.rel (0) target = $region9
    $region8: #{lstm_nn_forward.1} parent=1 // pred_region
      _
    $region9: #{lstm_nn_forward.1} parent=1 // pred_fallthru
      _
    // Predicated region
    $region10: #{lstm_nn_forward.1} parent=1 // pred_check
      _
    $region11: #{lstm_nn_forward.1} parent=1 // pred_check_branch
      %22 = sbr.rel (0) target = $region13
    $region12: #{lstm_nn_forward.1} parent=1 // pred_region
      _
    $region13: #{lstm_nn_forward.1} parent=1 // pred_fallthru
      _
    // Predicated region
    $region14: #{lstm_nn_forward.1} parent=1 // pred_check
      _
    $region15: #{lstm_nn_forward.1} parent=1 // pred_check_branch
      %24 = sbr.rel (0) target = $region17
    $region16: #{lstm_nn_forward.1} parent=1 // pred_region
      _
    $region17: #{lstm_nn_forward.1} parent=1 // pred_fallthru
      _
    // Predicated region
    $region18: #{lstm_nn_forward.1} parent=1 // pred_check
      _
    $region19: #{lstm_nn_forward.1} parent=1 // pred_check_branch
      %26 = sbr.rel (0) target = $region21
    $region20: #{lstm_nn_forward.1} parent=1 // pred_region
      _
    $region21: #{lstm_nn_forward.1} parent=1 // pred_fallthru
      _
    // Predicated region
    $region22: #{lstm_nn_forward.1} parent=1 // pred_check
      _
    $region23: #{lstm_nn_forward.1} parent=1 // pred_check_branch
      %28 = sbr.rel (0) target = $region25
    $region24: #{lstm_nn_forward.1} parent=1 // pred_region
      _
    $region25: #{lstm_nn_forward.1} parent=1 // pred_fallthru
      _
    // Predicated region
    $region26: #{lstm_nn_forward.1} parent=1 // pred_check
      _
    $region27: #{lstm_nn_forward.1} parent=1 // pred_check_branch
      %30 = sbr.rel (0) target = $region29
    $region28: #{lstm_nn_forward.1} parent=1 // pred_region
      _
    $region29: #{lstm_nn_forward.1} parent=1 // pred_fallthru
      _
    // Predicated region
    $region30: #{lstm_nn_forward.1} parent=1 // pred_check
      _
    $region31: #{lstm_nn_forward.1} parent=1 // pred_check_branch
      %32 = sbr.rel (0) target = $region33
    $region32: #{lstm_nn_forward.1} parent=1 // pred_region
      _
    $region33: #{lstm_nn_forward.1} parent=1 // pred_fallthru
      _
    // Predicated region
    $region34: #{lstm_nn_forward.1} parent=1 // pred_check
      _
    $region35: #{lstm_nn_forward.1} parent=1 // pred_check_branch
      %34 = sbr.rel (0) target = $region37
    $region36: #{lstm_nn_forward.1} parent=1 // pred_region
      _
    $region37: #{lstm_nn_forward.1} parent=1 // pred_fallthru
      _
    // Predicated region
    $region38: #{lstm_nn_forward.1} parent=1 // pred_check
      _
    $region39: #{lstm_nn_forward.1} parent=1 // pred_check_branch
      %36 = sbr.rel (0) target = $region41
    $region40: #{lstm_nn_forward.1} parent=1 // pred_region
      _
    $region41: #{lstm_nn_forward.1} parent=1 // pred_fallthru
      _
    // Predicated region
    $region42: #{lstm_nn_forward.1} parent=1 // pred_check
      _
    $region43: #{lstm_nn_forward.1} parent=1 // pred_check_branch
      %38 = sbr.rel (0) target = $region45
    $region44: #{lstm_nn_forward.1} parent=1 // pred_region
      _
    $region45: #{lstm_nn_forward.1} parent=1 // pred_fallthru
      _
    %v39 = vld [vmem:[%s0] sm:$0x1]
    %v40 = vld [vmem:[%s0 + $0x8] sm:$0x1]
    %v41 = vld [vmem:[%s1] sm:$0xff]
    %v42 = vld [vmem:[%s4] sm:$0x1]
    %v44 = vlaneseq
    %v45 = vshrl.u32 %v44, 7
    %v46 = vsub.s32 0, %v45
    %v47 = vrot.slane %v42, %v46
    %v51 = vrot.slane %v40, 7
    %vm52 = vcmask 1041409
    %v53 = vsel %vm52, %v51, %v39
    %vm54 = vcmask 64512
    %v55 = vsel %vm54, %v53, 0
    %57 = vmatprep.subr.mxu0 0.0
    %58 = vmatpush1.msra.mxu0 %v41
    %59 = vmatprep.subr.mxu0 0.0
    %60 = vmatpush1.msra.mxu0 0.0
    %61 = vmatprep.subr.mxu0 0.0
    %62 = vmatpush1.msra.mxu0 0.0
    %63 = vmatprep.subr.mxu0 0.0
    %64 = vmatpush1.msra.mxu0 0.0
    %65 = vmatprep.subr.mxu0 0.0
    %66 = vmatpush1.msra.mxu0 0.0
    %67 = vmatprep.subr.mxu0 0.0
    %68 = vmatpush1.msra.mxu0 0.0
    %69 = vmatprep.subr.mxu0 0.0
    %70 = vmatpush1.msra.mxu0 0.0
    %71 = vmatprep.subr.mxu0 0.0
    %72 = vmatpush1.msra.mxu0 0.0
    %73 = vmatprep.subr.mxu0 0.0
    %74 = vmatpush1.msra.mxu0 0.0
    %75 = vmatprep.subr.mxu0 0.0
    %76 = vmatpush1.msra.mxu0 0.0
    %77 = vmatprep.subr.mxu0 0.0
    %78 = vmatpush1.msra.mxu0 0.0
    %79 = vmatprep.subr.mxu0 0.0
    %80 = vmatpush1.msra.mxu0 0.0
    %81 = vmatprep.subr.mxu0 0.0
    %82 = vmatpush1.msra.mxu0 0.0
    %83 = vmatprep.subr.mxu0 0.0
    %84 = vmatpush1.msra.mxu0 0.0
    %85 = vmatprep.subr.mxu0 0.0
    %86 = vmatpush1.msra.mxu0 0.0
    %87 = vmatprep.subr.mxu0 0.0
    %88 = vmatpush1.msra.mxu0 0.0
    %89 = vmatprep.subr.mxu0 0.0
    %90 = vmatpush1.msra.mxu0 0.0
    %91 = vmatprep.subr.mxu0 0.0
    %92 = vmatpush1.msra.mxu0 0.0
    %93 = vmatprep.subr.mxu0 0.0
    %94 = vmatpush1.msra.mxu0 0.0
    %95 = vmatprep.subr.mxu0 0.0
    %96 = vmatpush1.msra.mxu0 0.0
    %97 = vmatprep.subr.mxu0 0.0
    %98 = vmatpush1.msra.mxu0 0.0
    %99 = vmatprep.subr.mxu0 0.0
    %100 = vmatpush1.msra.mxu0 0.0
    %101 = vmatprep.subr.mxu0 0.0
    %102 = vmatpush1.msra.mxu0 0.0
    %103 = vmatprep.subr.mxu0 0.0
    %104 = vmatpush1.msra.mxu0 0.0
    %105 = vmatprep.subr.mxu0 0.0
    %106 = vmatpush1.msra.mxu0 0.0
    %107 = vmatprep.subr.mxu0 0.0
    %108 = vmatpush1.msra.mxu0 0.0
    %109 = vmatprep.subr.mxu0 0.0
    %110 = vmatpush1.msra.mxu0 0.0
    %111 = vmatprep.subr.mxu0 0.0
    %112 = vmatpush1.msra.mxu0 0.0
    %113 = vmatprep.subr.mxu0 0.0
    %114 = vmatpush1.msra.mxu0 0.0
    %115 = vmatprep.subr.mxu0 0.0
    %116 = vmatpush1.msra.mxu0 0.0
    %117 = vmatprep.subr.mxu0 0.0
    %118 = vmatpush1.msra.mxu0 0.0
    %119 = vmatprep.subr.mxu0 0.0
    %120 = vmatpush1.msra.mxu0 0.0
    %121 = vmatprep.mubr.f32.mxu0 0.0
    %122 = vmatmul.mubr.f32.gmra.mrb[0].mxu0 %v55
    %v123 = vpop.f32.mrb[0].mxu0
    %v124 = vadd.f32 %v47, %v123
    %v125 = vpop.f32.mrb[0].mxu0
    %126 = vdwg.mxu0
    %v127 = vld [vmem:[%s2] sm:$0xff]
    %v128 = vld [vmem:[%s5] sm:$0x1]
    %v130 = vlaneseq
    %v131 = vshrl.u32 %v130, 7
    %v132 = vsub.s32 0, %v131
    %v133 = vrot.slane %v128, %v132
    %135 = vmatprep.subr.mxu0 0.0
    %136 = vmatpush1.msra.mxu0 %v127
    %137 = vmatprep.subr.mxu0 0.0
    %138 = vmatpush1.msra.mxu0 0.0
    %139 = vmatprep.subr.mxu0 0.0
    %140 = vmatpush1.msra.mxu0 0.0
    %141 = vmatprep.subr.mxu0 0.0
    %142 = vmatpush1.msra.mxu0 0.0
    %143 = vmatprep.subr.mxu0 0.0
    %144 = vmatpush1.msra.mxu0 0.0
    %145 = vmatprep.subr.mxu0 0.0
    %146 = vmatpush1.msra.mxu0 0.0
    %147 = vmatprep.subr.mxu0 0.0
    %148 = vmatpush1.msra.mxu0 0.0
    %149 = vmatprep.subr.mxu0 0.0
    %150 = vmatpush1.msra.mxu0 0.0
    %151 = vmatprep.subr.mxu0 0.0
    %152 = vmatpush1.msra.mxu0 0.0
    %153 = vmatprep.subr.mxu0 0.0
    %154 = vmatpush1.msra.mxu0 0.0
    %155 = vmatprep.subr.mxu0 0.0
    %156 = vmatpush1.msra.mxu0 0.0
    %157 = vmatprep.subr.mxu0 0.0
    %158 = vmatpush1.msra.mxu0 0.0
    %159 = vmatprep.subr.mxu0 0.0
    %160 = vmatpush1.msra.mxu0 0.0
    %161 = vmatprep.subr.mxu0 0.0
    %162 = vmatpush1.msra.mxu0 0.0
    %163 = vmatprep.subr.mxu0 0.0
    %164 = vmatpush1.msra.mxu0 0.0
    %165 = vmatprep.subr.mxu0 0.0
    %166 = vmatpush1.msra.mxu0 0.0
    %167 = vmatprep.subr.mxu0 0.0
    %168 = vmatpush1.msra.mxu0 0.0
    %169 = vmatprep.subr.mxu0 0.0
    %170 = vmatpush1.msra.mxu0 0.0
    %171 = vmatprep.subr.mxu0 0.0
    %172 = vmatpush1.msra.mxu0 0.0
    %173 = vmatprep.subr.mxu0 0.0
    %174 = vmatpush1.msra.mxu0 0.0
    %175 = vmatprep.subr.mxu0 0.0
    %176 = vmatpush1.msra.mxu0 0.0
    %177 = vmatprep.subr.mxu0 0.0
    %178 = vmatpush1.msra.mxu0 0.0
    %179 = vmatprep.subr.mxu0 0.0
    %180 = vmatpush1.msra.mxu0 0.0
    %181 = vmatprep.subr.mxu0 0.0
    %182 = vmatpush1.msra.mxu0 0.0
    %183 = vmatprep.subr.mxu0 0.0
    %184 = vmatpush1.msra.mxu0 0.0
    %185 = vmatprep.subr.mxu0 0.0
    %186 = vmatpush1.msra.mxu0 0.0
    %187 = vmatprep.subr.mxu0 0.0
    %188 = vmatpush1.msra.mxu0 0.0
    %189 = vmatprep.subr.mxu0 0.0
    %190 = vmatpush1.msra.mxu0 0.0
    %191 = vmatprep.subr.mxu0 0.0
    %192 = vmatpush1.msra.mxu0 0.0
    %193 = vmatprep.subr.mxu0 0.0
    %194 = vmatpush1.msra.mxu0 0.0
    %195 = vmatprep.subr.mxu0 0.0
    %196 = vmatpush1.msra.mxu0 0.0
    %197 = vmatprep.subr.mxu0 0.0
    %198 = vmatpush1.msra.mxu0 0.0
    %199 = vmatprep.mubr.f32.mxu0 0.0
    %200 = vmatmul.mubr.f32.gmra.mrb[0].mxu0 %v55
    %v201 = vpop.f32.mrb[0].mxu0
    %v202 = vadd.f32 %v133, %v201
    %v203 = vpop.f32.mrb[0].mxu0
    %204 = vdwg.mxu0
    %v205 = vld [vmem:[%s3] sm:$0xff]
    %v206 = vld [vmem:[%s6] sm:$0x1]
    %v208 = vlaneseq
    %v209 = vshrl.u32 %v208, 7
    %v210 = vsub.s32 0, %v209
    %v211 = vrot.slane %v206, %v210
    %213 = vmatprep.subr.mxu0 0.0
    %214 = vmatpush1.msra.mxu0 %v205
    %215 = vmatprep.subr.mxu0 0.0
    %216 = vmatpush1.msra.mxu0 0.0
    %217 = vmatprep.subr.mxu0 0.0
    %218 = vmatpush1.msra.mxu0 0.0
    %219 = vmatprep.subr.mxu0 0.0
    %220 = vmatpush1.msra.mxu0 0.0
    %221 = vmatprep.subr.mxu0 0.0
    %222 = vmatpush1.msra.mxu0 0.0
    %223 = vmatprep.subr.mxu0 0.0
    %224 = vmatpush1.msra.mxu0 0.0
    %225 = vmatprep.subr.mxu0 0.0
    %226 = vmatpush1.msra.mxu0 0.0
    %227 = vmatprep.subr.mxu0 0.0
    %228 = vmatpush1.msra.mxu0 0.0
    %229 = vmatprep.subr.mxu0 0.0
    %230 = vmatpush1.msra.mxu0 0.0
    %231 = vmatprep.subr.mxu0 0.0
    %232 = vmatpush1.msra.mxu0 0.0
    %233 = vmatprep.subr.mxu0 0.0
    %234 = vmatpush1.msra.mxu0 0.0
    %235 = vmatprep.subr.mxu0 0.0
    %236 = vmatpush1.msra.mxu0 0.0
    %237 = vmatprep.subr.mxu0 0.0
    %238 = vmatpush1.msra.mxu0 0.0
    %239 = vmatprep.subr.mxu0 0.0
    %240 = vmatpush1.msra.mxu0 0.0
    %241 = vmatprep.subr.mxu0 0.0
    %242 = vmatpush1.msra.mxu0 0.0
    %243 = vmatprep.subr.mxu0 0.0
    %244 = vmatpush1.msra.mxu0 0.0
    %245 = vmatprep.subr.mxu0 0.0
    %246 = vmatpush1.msra.mxu0 0.0
    %247 = vmatprep.subr.mxu0 0.0
    %248 = vmatpush1.msra.mxu0 0.0
    %249 = vmatprep.subr.mxu0 0.0
    %250 = vmatpush1.msra.mxu0 0.0
    %251 = vmatprep.subr.mxu0 0.0
    %252 = vmatpush1.msra.mxu0 0.0
    %253 = vmatprep.subr.mxu0 0.0
    %254 = vmatpush1.msra.mxu0 0.0
    %255 = vmatprep.subr.mxu0 0.0
    %256 = vmatpush1.msra.mxu0 0.0
    %257 = vmatprep.subr.mxu0 0.0
    %258 = vmatpush1.msra.mxu0 0.0
    %259 = vmatprep.subr.mxu0 0.0
    %260 = vmatpush1.msra.mxu0 0.0
    %261 = vmatprep.subr.mxu0 0.0
    %262 = vmatpush1.msra.mxu0 0.0
    %263 = vmatprep.subr.mxu0 0.0
    %264 = vmatpush1.msra.mxu0 0.0
    %265 = vmatprep.subr.mxu0 0.0
    %266 = vmatpush1.msra.mxu0 0.0
    %267 = vmatprep.subr.mxu0 0.0
    %268 = vmatpush1.msra.mxu0 0.0
    %269 = vmatprep.subr.mxu0 0.0
    %270 = vmatpush1.msra.mxu0 0.0
    %271 = vmatprep.subr.mxu0 0.0
    %272 = vmatpush1.msra.mxu0 0.0
    %273 = vmatprep.subr.mxu0 0.0
    %274 = vmatpush1.msra.mxu0 0.0
    %275 = vmatprep.subr.mxu0 0.0
    %276 = vmatpush1.msra.mxu0 0.0
    %277 = vmatprep.mubr.f32.mxu0 0.0
    %278 = vmatmul.mubr.f32.gmra.mrb[0].mxu0 %v55
    %v279 = vpop.f32.mrb[0].mxu0
    %v280 = vadd.f32 %v211, %v279
    %v281 = vpop.f32.mrb[0].mxu0
    %282 = vdwg.mxu0
    %v283 = vxor.u32 %v124, 2147483648
    %v284 = vmul.f32 %v283, 1.442695
    %v285 = vpow.pop %v284
    %v286 = vadd.f32 %v285, 1.0
    %v287 = vrcp.pop %v286
    %v288 = vmul.f32 1.0, %v287
    %v289 = vtanh.pop %v202
    %v290 = vxor.u32 %v280, 2147483648
    %v291 = vmul.f32 %v290, 1.442695
    %v292 = vpow.pop %v291
    %v293 = vadd.f32 %v292, 1.0
    %v294 = vrcp.pop %v293
    %v295 = vmul.f32 1.0, %v294
    %v296 = vmul.f32 %v288, %v289
    %v297 = vtanh.pop %v296
    %v298 = vmul.f32 %v295, %v297
    %vm299 = vcmask 254976
    %v300 = vsel %vm299, %v298, 0.0
    %301 = vadd.xlane.f32.xlu0 %v300
    %v302 = vpop.xlane.xlu0 %301
    %v303 = vmul.f32 %v298, %v298
    %v304 = vsel %vm299, %v303, 0.0
    %305 = vadd.xlane.f32.xlu0 %v304
    %v306 = vpop.xlane.xlu0 %305
    %v307 = vmul.f32 %v302, 0.03125
    %v308 = vmul.f32 %v306, 0.03125
    %v309 = vmul.f32 %v307, %v307
    %v310 = vsub.f32 %v308, %v309
    %v311 = vsub.f32 %v298, %v307
    %v312 = vadd.f32 %v310, 1e-05
    %v313 = vrsqrt.pop %v312
    %v314 = vmul.f32 %v311, %v313
    %v315 = vld [vmem:[%s7] sm:$0x1]
    %v317 = vlaneseq
    %v318 = vshrl.u32 %v317, 7
    %v319 = vsub.s32 0, %v318
    %v320 = vrot.slane %v315, %v319
    %v322 = vmul.f32 %v314, %v320
    %v323 = vld [vmem:[%s8] sm:$0x1]
    %v325 = vlaneseq
    %v326 = vshrl.u32 %v325, 7
    %v327 = vsub.s32 0, %v326
    %v328 = vrot.slane %v323, %v327
    %v330 = vadd.f32 %v322, %v328
    %v331 = vld [vmem:[%s9] sm:$0xff]
    %v332 = vld [vmem:[%s9 + $0x8] sm:$0xff]
    %v333 = vld [vmem:[%s9 + $0x10] sm:$0xff]
    %v334 = vld [vmem:[%s9 + $0x18] sm:$0xff]
    %v335 = vld [vmem:[%s10] sm:$0x1]
    %v337 = vlaneseq
    %v338 = vshrl.u32 %v337, 7
    %v339 = vsub.s32 0, %v338
    %v340 = vrot.slane %v335, %v339
    %vm342 = vcmask 261120
    %v344 = vsel %vm342, %v330, 0
    %346 = vmatprep.subr.mxu0 0.0
    %347 = vmatpush1.msra.mxu0 %v331
    %348 = vmatprep.subr.mxu0 0.0
    %349 = vmatpush1.msra.mxu0 %v332
    %350 = vmatprep.subr.mxu0 0.0
    %351 = vmatpush1.msra.mxu0 %v333
    %352 = vmatprep.subr.mxu0 0.0
    %353 = vmatpush1.msra.mxu0 %v334
    %354 = vmatprep.subr.mxu0 0.0
    %355 = vmatpush1.msra.mxu0 0.0
    %356 = vmatprep.subr.mxu0 0.0
    %357 = vmatpush1.msra.mxu0 0.0
    %358 = vmatprep.subr.mxu0 0.0
    %359 = vmatpush1.msra.mxu0 0.0
    %360 = vmatprep.subr.mxu0 0.0
    %361 = vmatpush1.msra.mxu0 0.0
    %362 = vmatprep.subr.mxu0 0.0
    %363 = vmatpush1.msra.mxu0 0.0
    %364 = vmatprep.subr.mxu0 0.0
    %365 = vmatpush1.msra.mxu0 0.0
    %366 = vmatprep.subr.mxu0 0.0
    %367 = vmatpush1.msra.mxu0 0.0
    %368 = vmatprep.subr.mxu0 0.0
    %369 = vmatpush1.msra.mxu0 0.0
    %370 = vmatprep.subr.mxu0 0.0
    %371 = vmatpush1.msra.mxu0 0.0
    %372 = vmatprep.subr.mxu0 0.0
    %373 = vmatpush1.msra.mxu0 0.0
    %374 = vmatprep.subr.mxu0 0.0
    %375 = vmatpush1.msra.mxu0 0.0
    %376 = vmatprep.subr.mxu0 0.0
    %377 = vmatpush1.msra.mxu0 0.0
    %378 = vmatprep.subr.mxu0 0.0
    %379 = vmatpush1.msra.mxu0 0.0
    %380 = vmatprep.subr.mxu0 0.0
    %381 = vmatpush1.msra.mxu0 0.0
    %382 = vmatprep.subr.mxu0 0.0
    %383 = vmatpush1.msra.mxu0 0.0
    %384 = vmatprep.subr.mxu0 0.0
    %385 = vmatpush1.msra.mxu0 0.0
    %386 = vmatprep.subr.mxu0 0.0
    %387 = vmatpush1.msra.mxu0 0.0
    %388 = vmatprep.subr.mxu0 0.0
    %389 = vmatpush1.msra.mxu0 0.0
    %390 = vmatprep.subr.mxu0 0.0
    %391 = vmatpush1.msra.mxu0 0.0
    %392 = vmatprep.subr.mxu0 0.0
    %393 = vmatpush1.msra.mxu0 0.0
    %394 = vmatprep.subr.mxu0 0.0
    %395 = vmatpush1.msra.mxu0 0.0
    %396 = vmatprep.subr.mxu0 0.0
    %397 = vmatpush1.msra.mxu0 0.0
    %398 = vmatprep.subr.mxu0 0.0
    %399 = vmatpush1.msra.mxu0 0.0
    %400 = vmatprep.subr.mxu0 0.0
    %401 = vmatpush1.msra.mxu0 0.0
    %402 = vmatprep.subr.mxu0 0.0
    %403 = vmatpush1.msra.mxu0 0.0
    %404 = vmatprep.subr.mxu0 0.0
    %405 = vmatpush1.msra.mxu0 0.0
    %406 = vmatprep.subr.mxu0 0.0
    %407 = vmatpush1.msra.mxu0 0.0
    %408 = vmatprep.subr.mxu0 0.0
    %409 = vmatpush1.msra.mxu0 0.0
    %410 = vmatprep.mubr.f32.mxu0 0.0
    %411 = vmatmul.mubr.f32.gmra.mrb[0].mxu0 %v344
    %v412 = vpop.f32.mrb[0].mxu0
    %v413 = vadd.f32 %v340, %v412
    %v414 = vpop.f32.mrb[0].mxu0
    %415 = vdwg.mxu0
    %v418 = vunpack.c.l.s4 1966171168
    %v419 = vunpack.c.0.s8 %v418
    %v420 = vlaneseq
    %v421 = vshrl.u32 %v420, 7
    %v422 = vsub.s32 %v419, %v421
    %v423 = vrot.slane %v413, %v422
    %v424 = vcombine.high %v423, %v423
    %v426 = vunpack.c.l.s4 1966171168
    %v427 = vunpack.c.0.s8 %v426
    %v428 = vlaneseq
    %v429 = vshrl.u32 %v428, 7
    %v430 = vsub.s32 %v427, %v429
    %v431 = vrot.slane %v423, %v430
    %v433 = vunpack.c.l.s4 1966171168
    %v434 = vunpack.c.0.s8 %v433
    %v435 = vlaneseq
    %v436 = vshrl.u32 %v435, 7
    %v437 = vsub.s32 %v434, %v436
    %v438 = vrot.slane %v424, %v437
    %vm441 = vcmask 57344
    %442 = vst.msk [vmem:[#allocation2] sm:$0x1] %vm441, %v431
    %443 = vst.msk [vmem:[#allocation2 + $0x1] sm:$0x1] %vm441, %v438
    // Predicated region
    $region46: #{lstm_nn_forward.1} parent=1 // pred_check
      _
    $region47: #{lstm_nn_forward.1} parent=1 // pred_check_branch
      %445 = sbr.rel (0) target = $region49
    $region48: #{lstm_nn_forward.1} parent=1 // pred_region
      %s447 = ssub.s32 32, 32
      %448 = vsyncadd [#allocation3], %s447
      %s449 = sshll.u32 [#allocation2], 4
      %s450 = int_to_ptr.vmem [resolvable:$true] %s449
      %455 = dma.vmem_to_hbm [thread:$0]  %s450, 32, %s11, [#allocation3], 16, 16, 1
    $region49: #{lstm_nn_forward.1} parent=1 // pred_fallthru
      _
    // Predicated region
    $region50: #{lstm_nn_forward.1} parent=1 // pred_check
      _
    $region51: #{lstm_nn_forward.1} parent=1 // pred_check_branch
      %457 = sbr.rel (0) target = $region53
    $region52: #{lstm_nn_forward.1} parent=1 // pred_region
      %458 = dma.done [#allocation3], 32
    $region53: #{lstm_nn_forward.1} parent=1 // pred_fallthru
      _
    %459 = vsyncpa [#allocation3], 1

</llo_original>
